<compile_context>
chip_gen: v7x
topology: tpu7x:2x2x1
jax: 0.10.0
libtpu: 0.0.40
codegen_flags: <defaults>
</compile_context>

<pallas_src>
import functools

import jax
import jax.numpy as jnp
from jax import lax
from jax.experimental import pallas as pl
from jax.experimental.pallas import tpu as pltpu


def _fused_relu_dwconv_bn_relu_kernel(x_ref, w_ref, gamma_ref, beta_ref, o_ref,
                                      *, H, W, eps):
    # x_ref     : (N, C, H*W) f32   input, channels on sublanes, H*W on lanes
    # w_ref     : (C, 9)      f32   depthwise 3x3 taps (tap-major on lanes)
    # gamma_ref : (C, 1)      f32
    # beta_ref  : (C, 1)      f32
    # o_ref     : (N, C, H*W) f32   output (written exactly once per image)
    N, C, HW = x_ref.shape

    # ---- loop-invariant boundary masks (f32 so masking is a single vmul) ----
    pos = lax.broadcasted_iota(jnp.int32, (1, HW), 1)
    if (W & (W - 1)) == 0:                              # power-of-two width
        col = jnp.bitwise_and(pos, W - 1)
    else:
        col = lax.rem(pos, W)
    m_top = (pos >= W).astype(jnp.float32)              # row h-1 exists (dy=-1)
    m_bot = (pos < (H - 1) * W).astype(jnp.float32)     # row h+1 exists (dy=+1)
    m_left = (col >= 1).astype(jnp.float32)             # col w-1 exists (dx=-1)
    m_right = (col < (W - 1)).astype(jnp.float32)       # col w+1 exists (dx=+1)

    # ---- loop-invariant per-channel taps: w_[ky][kx] is (C, 1) --------------
    wts = w_ref[...]                                    # (C, 9)
    w_ = [[wts[:, (ky * 3 + kx):(ky * 3 + kx) + 1] for kx in range(3)]
          for ky in range(3)]

    inv_count = 1.0 / float(N * HW)

    # ---- pass A: ReLU + row-factored depthwise 3x3 + single-pass stats ------
    csum = jnp.zeros((C, 1), jnp.float32)
    cssq = jnp.zeros((C, 1), jnp.float32)
    accs = []                                           # live conv results
    for n in range(N):
        x = jnp.maximum(x_ref[n], 0.0)                  # ReLU; (C, HW)
        # neighbour columns w-1 / w+1 (wrapped lanes zeroed by column masks)
        x_l = pltpu.roll(x, shift=1, axis=1) * m_left
        x_r = pltpu.roll(x, shift=HW - 1, axis=1) * m_right
        # horizontal partials, one per kernel row ky (dy = ky - 1)
        s0 = w_[0][0] * x_l + w_[0][1] * x + w_[0][2] * x_r
        s1 = w_[1][0] * x_l + w_[1][1] * x + w_[1][2] * x_r
        s2 = w_[2][0] * x_l + w_[2][1] * x + w_[2][2] * x_r
        # vertical combine: two +/-W lane rolls masked at image top/bottom
        acc = s1
        acc = acc + pltpu.roll(s0, shift=W, axis=1) * m_top
        acc = acc + pltpu.roll(s2, shift=HW - W, axis=1) * m_bot
        accs.append(acc)
        csum = csum + jnp.sum(acc, axis=1, keepdims=True)
        cssq = cssq + jnp.sum(acc * acc, axis=1, keepdims=True)

    # ---- batch-norm scale / bias (rsqrt on the EUP, essentially free) -------
    mean = csum * inv_count                             # (C, 1)
    var = jnp.maximum(cssq * inv_count - mean * mean, 0.0)
    inv_std = lax.rsqrt(var + eps)
    scale = gamma_ref[...] * inv_std                    # (C, 1)
    bias = beta_ref[...] - mean * scale                 # (C, 1)

    # ---- pass B: BN affine + ReLU on the live accumulators, single store ----
    for n in range(N):
        o_ref[n] = jnp.maximum(accs[n] * scale + bias, 0.0)


def relu_dwconv_bn_relu(x_nchw, weight_oihw, gamma, beta, eps=1e-3):
    N, C, H, W = x_nchw.shape
    assert weight_oihw.shape == (C, 1, 3, 3)
    HW = H * W

    # Pure layout plumbing: contiguous reshapes only (no transpose, no pad).
    x_flat = x_nchw.reshape(N, C, HW).astype(jnp.float32)
    w = weight_oihw.reshape(C, 9).astype(jnp.float32)
    g = gamma.reshape(C, 1).astype(jnp.float32)
    b = beta.reshape(C, 1).astype(jnp.float32)

    # VMEM budget for the monolithic single-block design:
    # double-buffered input + output blocks plus the live conv accumulators.
    block_bytes = 4 * N * C * HW
    vmem_needed = 5 * block_bytes + (4 << 20)
    # TODO(synk): for production-sized N/H/W that exceed this budget, switch to
    # a tiled two-phase design (grid over N / H-row tiles marked "parallel",
    # persistent (C,) sum/sumsq accumulators, then a BN-apply phase).
    assert vmem_needed <= (48 << 20), "shape too large for the monolithic kernel"
    vmem_limit = min(max(vmem_needed, 32 << 20), 48 << 20)

    kernel = functools.partial(_fused_relu_dwconv_bn_relu_kernel,
                               H=H, W=W, eps=float(eps))

    out_flat = pl.pallas_call(
        kernel,
        out_shape=jax.ShapeDtypeStruct((N, C, HW), jnp.float32),
        grid=(1,),
        in_specs=[
            pl.BlockSpec((N, C, HW), lambda i: (0, 0, 0)),
            pl.BlockSpec((C, 9), lambda i: (0, 0)),
            pl.BlockSpec((C, 1), lambda i: (0, 0)),
            pl.BlockSpec((C, 1), lambda i: (0, 0)),
        ],
        out_specs=pl.BlockSpec((N, C, HW), lambda i: (0, 0, 0)),
        compiler_params=pltpu.CompilerParams(
            dimension_semantics=("arbitrary",),
            vmem_limit_bytes=vmem_limit),
    )(x_flat, w, g, b)

    return out_flat.reshape(N, C, H, W)


# ---------------------------------------------------------------------------
# Pure-JAX reference for verification (training-mode batch statistics).
# ---------------------------------------------------------------------------
def reference(x_nchw, weight_oihw, gamma, beta, eps=1e-3):
    x = jnp.maximum(x_nchw, 0.0)
    y = jax.lax.conv_general_dilated(
        x, weight_oihw, window_strides=(1, 1), padding=((1, 1), (1, 1)),
        dimension_numbers=("NCHW", "OIHW", "NCHW"),
        feature_group_count=x.shape[1])
    mean = jnp.mean(y, axis=(0, 2, 3), keepdims=True)
    var = jnp.mean((y - mean) ** 2, axis=(0, 2, 3), keepdims=True)
    yn = (y - mean) / jnp.sqrt(var + eps)
    yn = yn * gamma.reshape(1, -1, 1, 1) + beta.reshape(1, -1, 1, 1)
    return jnp.maximum(yn, 0.0)


if __name__ == "__main__":
    key = jax.random.PRNGKey(0)
    k_x, k_w, k_g, k_b = jax.random.split(key, 4)

    # Small shapes consistent with the module (channels fixed at 24 by the conv).
    N, C, H, W = 2, 24, 16, 16
    x = jax.random.normal(k_x, (N, C, H, W), dtype=jnp.float32)

    weight = jax.random.normal(k_w, (C, 1, 3, 3), dtype=jnp.float32) * 0.2
    gamma = 1.0 + 0.1 * jax.random.normal(k_g, (C,), dtype=jnp.float32)
    beta = 0.1 * jax.random.normal(k_b, (C,), dtype=jnp.float32)

    out = relu_dwconv_bn_relu(x, weight, gamma, beta)
    out = jax.block_until_ready(out)

    ref = reference(x, weight, gamma, beta)
    assert out.shape == (N, C, H, W)
    assert jnp.allclose(out, ref, atol=1e-4, rtol=1e-4)

    print("KERNEL_OK")
</pallas_src>

<mosaic_0001>
module attributes {stable_mosaic.version = 11 : i64} {
  func.func @_fused_relu_dwconv_bn_relu_kernel(%arg0: i32, %arg1: memref<2x24x256xf32, #tpu.memory_space<vmem>>, %arg2: memref<24x9xf32, #tpu.memory_space<vmem>>, %arg3: memref<24x1xf32, #tpu.memory_space<vmem>>, %arg4: memref<24x1xf32, #tpu.memory_space<vmem>>, %arg5: memref<2x24x256xf32, #tpu.memory_space<vmem>>) attributes {dimension_semantics = [#tpu.dimension_semantics<arbitrary>], iteration_bounds = array<i64: 1>, scalar_prefetch = 0 : i64, scratch_operands = 0 : i64, tpu.core_type = #tpu.core_type<tc>, window_params = [{pipeline_mode = #tpu.pipeline_mode<synchronous>, transform_indices = @transform_0, window_bounds = array<i64: 2, 24, 256>}, {pipeline_mode = #tpu.pipeline_mode<synchronous>, transform_indices = @transform_1, window_bounds = array<i64: 24, 9>}, {pipeline_mode = #tpu.pipeline_mode<synchronous>, transform_indices = @transform_2, window_bounds = array<i64: 24, 1>}, {pipeline_mode = #tpu.pipeline_mode<synchronous>, transform_indices = @transform_3, window_bounds = array<i64: 24, 1>}, {pipeline_mode = #tpu.pipeline_mode<synchronous>, transform_indices = @transform_4, window_bounds = array<i64: 2, 24, 256>}]} {
    %0 = tpu.iota {dimensions = array<i32: 1>} : vector<1x256xi32>
    %c15_i32 = arith.constant 15 : i32
    %1 = vector.broadcast %c15_i32 : i32 to vector<1x256xi32>
    %2 = arith.andi %0, %1 : vector<1x256xi32>
    %c16_i32 = arith.constant 16 : i32
    %3 = vector.broadcast %c16_i32 : i32 to vector<1x256xi32>
    %4 = arith.cmpi sge, %0, %3 : vector<1x256xi32>
    %5 = arith.extui %4 : vector<1x256xi1> to vector<1x256xi32>
    %6 = arith.sitofp %5 : vector<1x256xi32> to vector<1x256xf32>
    %c240_i32 = arith.constant 240 : i32
    %7 = vector.broadcast %c240_i32 : i32 to vector<1x256xi32>
    %8 = arith.cmpi slt, %0, %7 : vector<1x256xi32>
    %9 = arith.extui %8 : vector<1x256xi1> to vector<1x256xi32>
    %10 = arith.sitofp %9 : vector<1x256xi32> to vector<1x256xf32>
    %c1_i32 = arith.constant 1 : i32
    %11 = vector.broadcast %c1_i32 : i32 to vector<1x256xi32>
    %12 = arith.cmpi sge, %2, %11 : vector<1x256xi32>
    %13 = arith.extui %12 : vector<1x256xi1> to vector<1x256xi32>
    %14 = arith.sitofp %13 : vector<1x256xi32> to vector<1x256xf32>
    %c15_i32_0 = arith.constant 15 : i32
    %15 = vector.broadcast %c15_i32_0 : i32 to vector<1x256xi32>
    %16 = arith.cmpi slt, %2, %15 : vector<1x256xi32>
    %17 = arith.extui %16 : vector<1x256xi1> to vector<1x256xi32>
    %18 = arith.sitofp %17 : vector<1x256xi32> to vector<1x256xf32>
    %c0 = arith.constant 0 : index
    %c0_1 = arith.constant 0 : index
    %19 = vector.load %arg2[%c0, %c0_1] : memref<24x9xf32, #tpu.memory_space<vmem>>, vector<24x9xf32>
    %20 = vector.extract_strided_slice %19 {offsets = [0, 0], sizes = [24, 1], strides = [1, 1]} : vector<24x9xf32> to vector<24x1xf32>
    %21 = vector.extract_strided_slice %19 {offsets = [0, 1], sizes = [24, 1], strides = [1, 1]} : vector<24x9xf32> to vector<24x1xf32>
    %22 = vector.extract_strided_slice %19 {offsets = [0, 2], sizes = [24, 1], strides = [1, 1]} : vector<24x9xf32> to vector<24x1xf32>
    %23 = vector.extract_strided_slice %19 {offsets = [0, 3], sizes = [24, 1], strides = [1, 1]} : vector<24x9xf32> to vector<24x1xf32>
    %24 = vector.extract_strided_slice %19 {offsets = [0, 4], sizes = [24, 1], strides = [1, 1]} : vector<24x9xf32> to vector<24x1xf32>
    %25 = vector.extract_strided_slice %19 {offsets = [0, 5], sizes = [24, 1], strides = [1, 1]} : vector<24x9xf32> to vector<24x1xf32>
    %26 = vector.extract_strided_slice %19 {offsets = [0, 6], sizes = [24, 1], strides = [1, 1]} : vector<24x9xf32> to vector<24x1xf32>
    %27 = vector.extract_strided_slice %19 {offsets = [0, 7], sizes = [24, 1], strides = [1, 1]} : vector<24x9xf32> to vector<24x1xf32>
    %28 = vector.extract_strided_slice %19 {offsets = [0, 8], sizes = [24, 1], strides = [1, 1]} : vector<24x9xf32> to vector<24x1xf32>
    %cst = arith.constant 0.000000e+00 : f32
    %29 = vector.broadcast %cst : f32 to vector<24x1xf32>
    %cst_2 = arith.constant 0.000000e+00 : f32
    %30 = vector.broadcast %cst_2 : f32 to vector<24x1xf32>
    %c0_3 = arith.constant 0 : index
    %c0_4 = arith.constant 0 : index
    %c0_5 = arith.constant 0 : index
    %31 = vector.load %arg1[%c0_3, %c0_4, %c0_5] : memref<2x24x256xf32, #tpu.memory_space<vmem>>, vector<1x24x256xf32>
    %32 = vector.shape_cast %31 : vector<1x24x256xf32> to vector<24x256xf32>
    %cst_6 = arith.constant 0.000000e+00 : f32
    %33 = vector.broadcast %cst_6 : f32 to vector<24x256xf32>
    %34 = arith.maximumf %32, %33 : vector<24x256xf32>
    %c1_i32_7 = arith.constant 1 : i32
    %35 = tpu.dynamic_rotate %34 by %c1_i32_7 dim 1 : vector<24x256xf32>, i32 -> vector<24x256xf32>
    %36 = vector.broadcast %14 : vector<1x256xf32> to vector<24x256xf32>
    %37 = arith.mulf %35, %36 : vector<24x256xf32>
    %c255_i32 = arith.constant 255 : i32
    %38 = tpu.dynamic_rotate %34 by %c255_i32 dim 1 : vector<24x256xf32>, i32 -> vector<24x256xf32>
    %39 = vector.broadcast %18 : vector<1x256xf32> to vector<24x256xf32>
    %40 = arith.mulf %38, %39 : vector<24x256xf32>
    %41 = vector.broadcast %20 : vector<24x1xf32> to vector<24x256xf32>
    %42 = arith.mulf %41, %37 : vector<24x256xf32>
    %43 = vector.broadcast %21 : vector<24x1xf32> to vector<24x256xf32>
    %44 = arith.mulf %43, %34 : vector<24x256xf32>
    %45 = arith.addf %42, %44 : vector<24x256xf32>
    %46 = vector.broadcast %22 : vector<24x1xf32> to vector<24x256xf32>
    %47 = arith.mulf %46, %40 : vector<24x256xf32>
    %48 = arith.addf %45, %47 : vector<24x256xf32>
    %49 = vector.broadcast %23 : vector<24x1xf32> to vector<24x256xf32>
    %50 = arith.mulf %49, %37 : vector<24x256xf32>
    %51 = vector.broadcast %24 : vector<24x1xf32> to vector<24x256xf32>
    %52 = arith.mulf %51, %34 : vector<24x256xf32>
    %53 = arith.addf %50, %52 : vector<24x256xf32>
    %54 = vector.broadcast %25 : vector<24x1xf32> to vector<24x256xf32>
    %55 = arith.mulf %54, %40 : vector<24x256xf32>
    %56 = arith.addf %53, %55 : vector<24x256xf32>
    %57 = vector.broadcast %26 : vector<24x1xf32> to vector<24x256xf32>
    %58 = arith.mulf %57, %37 : vector<24x256xf32>
    %59 = vector.broadcast %27 : vector<24x1xf32> to vector<24x256xf32>
    %60 = arith.mulf %59, %34 : vector<24x256xf32>
    %61 = arith.addf %58, %60 : vector<24x256xf32>
    %62 = vector.broadcast %28 : vector<24x1xf32> to vector<24x256xf32>
    %63 = arith.mulf %62, %40 : vector<24x256xf32>
    %64 = arith.addf %61, %63 : vector<24x256xf32>
    %c16_i32_8 = arith.constant 16 : i32
    %65 = tpu.dynamic_rotate %48 by %c16_i32_8 dim 1 : vector<24x256xf32>, i32 -> vector<24x256xf32>
    %66 = vector.broadcast %6 : vector<1x256xf32> to vector<24x256xf32>
    %67 = arith.mulf %65, %66 : vector<24x256xf32>
    %68 = arith.addf %56, %67 : vector<24x256xf32>
    %c240_i32_9 = arith.constant 240 : i32
    %69 = tpu.dynamic_rotate %64 by %c240_i32_9 dim 1 : vector<24x256xf32>, i32 -> vector<24x256xf32>
    %70 = vector.broadcast %10 : vector<1x256xf32> to vector<24x256xf32>
    %71 = arith.mulf %69, %70 : vector<24x256xf32>
    %72 = arith.addf %68, %71 : vector<24x256xf32>
    %cst_10 = arith.constant dense<0.000000e+00> : vector<24xf32>
    %73 = vector.multi_reduction <add>, %72, %cst_10 [1] : vector<24x256xf32> to vector<24xf32>
    %74 = vector.shape_cast %73 : vector<24xf32> to vector<24x1xf32>
    %75 = arith.addf %29, %74 : vector<24x1xf32>
    %76 = arith.mulf %72, %72 : vector<24x256xf32>
    %cst_11 = arith.constant dense<0.000000e+00> : vector<24xf32>
    %77 = vector.multi_reduction <add>, %76, %cst_11 [1] : vector<24x256xf32> to vector<24xf32>
    %78 = vector.shape_cast %77 : vector<24xf32> to vector<24x1xf32>
    %79 = arith.addf %30, %78 : vector<24x1xf32>
    %c1 = arith.constant 1 : index
    %c0_12 = arith.constant 0 : index
    %c0_13 = arith.constant 0 : index
    %80 = vector.load %arg1[%c1, %c0_12, %c0_13] : memref<2x24x256xf32, #tpu.memory_space<vmem>>, vector<1x24x256xf32>
    %81 = vector.shape_cast %80 : vector<1x24x256xf32> to vector<24x256xf32>
    %cst_14 = arith.constant 0.000000e+00 : f32
    %82 = vector.broadcast %cst_14 : f32 to vector<24x256xf32>
    %83 = arith.maximumf %81, %82 : vector<24x256xf32>
    %c1_i32_15 = arith.constant 1 : i32
    %84 = tpu.dynamic_rotate %83 by %c1_i32_15 dim 1 : vector<24x256xf32>, i32 -> vector<24x256xf32>
    %85 = vector.broadcast %14 : vector<1x256xf32> to vector<24x256xf32>
    %86 = arith.mulf %84, %85 : vector<24x256xf32>
    %c255_i32_16 = arith.constant 255 : i32
    %87 = tpu.dynamic_rotate %83 by %c255_i32_16 dim 1 : vector<24x256xf32>, i32 -> vector<24x256xf32>
    %88 = vector.broadcast %18 : vector<1x256xf32> to vector<24x256xf32>
    %89 = arith.mulf %87, %88 : vector<24x256xf32>
    %90 = vector.broadcast %20 : vector<24x1xf32> to vector<24x256xf32>
    %91 = arith.mulf %90, %86 : vector<24x256xf32>
    %92 = vector.broadcast %21 : vector<24x1xf32> to vector<24x256xf32>
    %93 = arith.mulf %92, %83 : vector<24x256xf32>
    %94 = arith.addf %91, %93 : vector<24x256xf32>
    %95 = vector.broadcast %22 : vector<24x1xf32> to vector<24x256xf32>
    %96 = arith.mulf %95, %89 : vector<24x256xf32>
    %97 = arith.addf %94, %96 : vector<24x256xf32>
    %98 = vector.broadcast %23 : vector<24x1xf32> to vector<24x256xf32>
    %99 = arith.mulf %98, %86 : vector<24x256xf32>
    %100 = vector.broadcast %24 : vector<24x1xf32> to vector<24x256xf32>
    %101 = arith.mulf %100, %83 : vector<24x256xf32>
    %102 = arith.addf %99, %101 : vector<24x256xf32>
    %103 = vector.broadcast %25 : vector<24x1xf32> to vector<24x256xf32>
    %104 = arith.mulf %103, %89 : vector<24x256xf32>
    %105 = arith.addf %102, %104 : vector<24x256xf32>
    %106 = vector.broadcast %26 : vector<24x1xf32> to vector<24x256xf32>
    %107 = arith.mulf %106, %86 : vector<24x256xf32>
    %108 = vector.broadcast %27 : vector<24x1xf32> to vector<24x256xf32>
    %109 = arith.mulf %108, %83 : vector<24x256xf32>
    %110 = arith.addf %107, %109 : vector<24x256xf32>
    %111 = vector.broadcast %28 : vector<24x1xf32> to vector<24x256xf32>
    %112 = arith.mulf %111, %89 : vector<24x256xf32>
    %113 = arith.addf %110, %112 : vector<24x256xf32>
    %c16_i32_17 = arith.constant 16 : i32
    %114 = tpu.dynamic_rotate %97 by %c16_i32_17 dim 1 : vector<24x256xf32>, i32 -> vector<24x256xf32>
    %115 = vector.broadcast %6 : vector<1x256xf32> to vector<24x256xf32>
    %116 = arith.mulf %114, %115 : vector<24x256xf32>
    %117 = arith.addf %105, %116 : vector<24x256xf32>
    %c240_i32_18 = arith.constant 240 : i32
    %118 = tpu.dynamic_rotate %113 by %c240_i32_18 dim 1 : vector<24x256xf32>, i32 -> vector<24x256xf32>
    %119 = vector.broadcast %10 : vector<1x256xf32> to vector<24x256xf32>
    %120 = arith.mulf %118, %119 : vector<24x256xf32>
    %121 = arith.addf %117, %120 : vector<24x256xf32>
    %cst_19 = arith.constant dense<0.000000e+00> : vector<24xf32>
    %122 = vector.multi_reduction <add>, %121, %cst_19 [1] : vector<24x256xf32> to vector<24xf32>
    %123 = vector.shape_cast %122 : vector<24xf32> to vector<24x1xf32>
    %124 = arith.addf %75, %123 : vector<24x1xf32>
    %125 = arith.mulf %121, %121 : vector<24x256xf32>
    %cst_20 = arith.constant dense<0.000000e+00> : vector<24xf32>
    %126 = vector.multi_reduction <add>, %125, %cst_20 [1] : vector<24x256xf32> to vector<24xf32>
    %127 = vector.shape_cast %126 : vector<24xf32> to vector<24x1xf32>
    %128 = arith.addf %79, %127 : vector<24x1xf32>
    %cst_21 = arith.constant 0.001953125 : f32
    %129 = vector.broadcast %cst_21 : f32 to vector<24x1xf32>
    %130 = arith.mulf %124, %129 : vector<24x1xf32>
    %cst_22 = arith.constant 0.001953125 : f32
    %131 = vector.broadcast %cst_22 : f32 to vector<24x1xf32>
    %132 = arith.mulf %128, %131 : vector<24x1xf32>
    %133 = arith.mulf %130, %130 : vector<24x1xf32>
    %134 = arith.subf %132, %133 : vector<24x1xf32>
    %cst_23 = arith.constant 0.000000e+00 : f32
    %135 = vector.broadcast %cst_23 : f32 to vector<24x1xf32>
    %136 = arith.maximumf %134, %135 : vector<24x1xf32>
    %cst_24 = arith.constant 1.000000e-03 : f32
    %137 = vector.broadcast %cst_24 : f32 to vector<24x1xf32>
    %138 = arith.addf %136, %137 : vector<24x1xf32>
    %139 = math.rsqrt %138 : vector<24x1xf32>
    %c0_25 = arith.constant 0 : index
    %c0_26 = arith.constant 0 : index
    %140 = vector.load %arg3[%c0_25, %c0_26] : memref<24x1xf32, #tpu.memory_space<vmem>>, vector<24x1xf32>
    %141 = arith.mulf %140, %139 : vector<24x1xf32>
    %c0_27 = arith.constant 0 : index
    %c0_28 = arith.constant 0 : index
    %142 = vector.load %arg4[%c0_27, %c0_28] : memref<24x1xf32, #tpu.memory_space<vmem>>, vector<24x1xf32>
    %143 = arith.mulf %130, %141 : vector<24x1xf32>
    %144 = arith.subf %142, %143 : vector<24x1xf32>
    %145 = vector.broadcast %141 : vector<24x1xf32> to vector<24x256xf32>
    %146 = arith.mulf %72, %145 : vector<24x256xf32>
    %147 = vector.broadcast %144 : vector<24x1xf32> to vector<24x256xf32>
    %148 = arith.addf %146, %147 : vector<24x256xf32>
    %cst_29 = arith.constant 0.000000e+00 : f32
    %149 = vector.broadcast %cst_29 : f32 to vector<24x256xf32>
    %150 = arith.maximumf %148, %149 : vector<24x256xf32>
    %c0_30 = arith.constant 0 : index
    %c0_31 = arith.constant 0 : index
    %c0_32 = arith.constant 0 : index
    %151 = vector.load %arg5[%c0_30, %c0_31, %c0_32] : memref<2x24x256xf32, #tpu.memory_space<vmem>>, vector<1x24x256xf32>
    %152 = vector.shape_cast %151 : vector<1x24x256xf32> to vector<24x256xf32>
    %153 = vector.shape_cast %150 : vector<24x256xf32> to vector<1x24x256xf32>
    tpu.vector_store %arg5[%c0_30, %c0_31, %c0_32], %153 {strides = array<i32>} : memref<2x24x256xf32, #tpu.memory_space<vmem>>, vector<1x24x256xf32>,
    %154 = vector.broadcast %141 : vector<24x1xf32> to vector<24x256xf32>
    %155 = arith.mulf %121, %154 : vector<24x256xf32>
    %156 = vector.broadcast %144 : vector<24x1xf32> to vector<24x256xf32>
    %157 = arith.addf %155, %156 : vector<24x256xf32>
    %cst_33 = arith.constant 0.000000e+00 : f32
    %158 = vector.broadcast %cst_33 : f32 to vector<24x256xf32>
    %159 = arith.maximumf %157, %158 : vector<24x256xf32>
    %c1_34 = arith.constant 1 : index
    %c0_35 = arith.constant 0 : index
    %c0_36 = arith.constant 0 : index
    %160 = vector.load %arg5[%c1_34, %c0_35, %c0_36] : memref<2x24x256xf32, #tpu.memory_space<vmem>>, vector<1x24x256xf32>
    %161 = vector.shape_cast %160 : vector<1x24x256xf32> to vector<24x256xf32>
    %162 = vector.shape_cast %159 : vector<24x256xf32> to vector<1x24x256xf32>
    tpu.vector_store %arg5[%c1_34, %c0_35, %c0_36], %162 {strides = array<i32>} : memref<2x24x256xf32, #tpu.memory_space<vmem>>, vector<1x24x256xf32>,
    return
  }
  func.func @transform_0(%arg0: i32) -> (i32, i32, i32) {
    %c0_i32 = arith.constant 0 : i32
    %c0_i32_0 = arith.constant 0 : i32
    %c0_i32_1 = arith.constant 0 : i32
    %c0_i32_2 = arith.constant 0 : i32
    return %c0_i32, %c0_i32_0, %c0_i32_1 : i32, i32, i32
  }
  func.func @transform_1(%arg0: i32) -> (i32, i32) {
    %c0_i32 = arith.constant 0 : i32
    %c0_i32_0 = arith.constant 0 : i32
    %c0_i32_1 = arith.constant 0 : i32
    return %c0_i32, %c0_i32_0 : i32, i32
  }
  func.func @transform_2(%arg0: i32) -> (i32, i32) {
    %c0_i32 = arith.constant 0 : i32
    %c0_i32_0 = arith.constant 0 : i32
    %c0_i32_1 = arith.constant 0 : i32
    return %c0_i32, %c0_i32_0 : i32, i32
  }
  func.func @transform_3(%arg0: i32) -> (i32, i32) {
    %c0_i32 = arith.constant 0 : i32
    %c0_i32_0 = arith.constant 0 : i32
    %c0_i32_1 = arith.constant 0 : i32
    return %c0_i32, %c0_i32_0 : i32, i32
  }
  func.func @transform_4(%arg0: i32) -> (i32, i32, i32) {
    %c0_i32 = arith.constant 0 : i32
    %c0_i32_0 = arith.constant 0 : i32
    %c0_i32_1 = arith.constant 0 : i32
    %c0_i32_2 = arith.constant 0 : i32
    return %c0_i32, %c0_i32_0, %c0_i32_1 : i32, i32, i32
  }
}

</mosaic_0001>

<llo_original>
// kernel: tpu_custom_call.1
$region0: #{tpu_custom_call.1}
  #allocation0 [shape = 'u32[]', space=smem, size = 0x4, offset = 0x4, fixed_abs, tag = 'smem constant byte address 0x4 - core index']
  #allocation1 [shape = 'u32[144,128]{1,0:T(1,128)}', space=vmem, size = 0x12000, scoped, tag = 'internal scratch']
  %s0 = inlined_call_operand.hbm [shape: f32[2,24,256], index: 0, kind: input, shape index: {}]
  %s1 = inlined_call_operand.vmem [shape: f32[24,9], index: 1, kind: input, shape index: {}]
  %s2 = inlined_call_operand.vmem [shape: f32[24,1], index: 2, kind: input, shape index: {}]
  %s3 = inlined_call_operand.vmem [shape: f32[24,1], index: 3, kind: input, shape index: {}]
  %s4 = inlined_call_operand.hbm [shape: f32[2,24,256], index: 4, kind: output, shape index: {}]
  %s5 = sld [smem:[#allocation0]]
  $region30: #{tpu_custom_call.1} parent=0
    _
  %s7 = ssub.s32 1, %s5
  %s8 = scalar_select 0, %s7, %s5
  $region1: #{tpu_custom_call.1} parent=0
    #allocation2 [shape = 'u8[49152]{0}', space=vmem, size = 0xc000, scoped, tag = 'input window, operand 0, single buffered']
    #allocation3 [shape = 's32[1]{0}', space=sflag, size = 0x4, scoped, tag = 'scoped memory for tpu_custom_call.1']
    #allocation4 [shape = 's32[1]{0}', space=sflag, size = 0x4, scoped, tag = 'scoped memory for tpu_custom_call.1']
    #allocation5 [shape = 'u8[49152]{0}', space=vmem, size = 0xc000, scoped, tag = 'output window, operand 0, single buffered']
    %9 = vsyncpa [#allocation3], 0
    %10 = vsyncpa [#allocation4], 0
    // Predicated region
    $region2: #{tpu_custom_call.1} parent=1 // pred_check
      _
    $region3: #{tpu_custom_call.1} parent=1 // pred_check_branch
      %12 = sbr.rel (0) target = $region5
    $region4: #{tpu_custom_call.1} parent=1 // pred_region
      %s14 = ssub.s32 1536, 1536
      %15 = vsyncadd [#allocation3], %s14
      %s16 = sshll.u32 [#allocation2], 4
      %s17 = int_to_ptr.vmem [resolvable:$true] %s16
      %22 = dma.hbm_to_vmem [thread:$0]  %s0, 1536, %s17, [#allocation3], 256, 256, 16
    $region5: #{tpu_custom_call.1} parent=1 // pred_fallthru
      _
    // Predicated region
    $region6: #{tpu_custom_call.1} parent=1 // pred_check
      _
    $region7: #{tpu_custom_call.1} parent=1 // pred_check_branch
      %24 = sbr.rel (0) target = $region9
    $region8: #{tpu_custom_call.1} parent=1 // pred_region
      _
    $region9: #{tpu_custom_call.1} parent=1 // pred_fallthru
      _
    // Predicated region
    $region10: #{tpu_custom_call.1} parent=1 // pred_check
      _
    $region11: #{tpu_custom_call.1} parent=1 // pred_check_branch
      %26 = sbr.rel (0) target = $region13
    $region12: #{tpu_custom_call.1} parent=1 // pred_region
      _
    $region13: #{tpu_custom_call.1} parent=1 // pred_fallthru
      _
    // Predicated region
    $region14: #{tpu_custom_call.1} parent=1 // pred_check
      _
    $region15: #{tpu_custom_call.1} parent=1 // pred_check_branch
      %28 = sbr.rel (0) target = $region17
    $region16: #{tpu_custom_call.1} parent=1 // pred_region
      _
    $region17: #{tpu_custom_call.1} parent=1 // pred_fallthru
      _
    // Predicated region
    $region18: #{tpu_custom_call.1} parent=1 // pred_check
      _
    $region19: #{tpu_custom_call.1} parent=1 // pred_check_branch
      %30 = sbr.rel (0) target = $region21
    $region20: #{tpu_custom_call.1} parent=1 // pred_region
      %31 = dma.done [#allocation3], 1536
    $region21: #{tpu_custom_call.1} parent=1 // pred_fallthru
      _
    %v32 = vlaneseq
    %v33 = vand.u32 %v32, 127
    %v34 = vadd.s32 %v33, 128
    %v35 = vand.u32 %v33, 15
    %v36 = vand.u32 %v34, 15
    %vm37 = vcmp.ge.s32.totalorder %v33, 16
    %vm38 = vcmp.ge.s32.totalorder %v34, 16
    %v39 = vsel %vm37, 1, 0
    %v40 = vsel %vm38, 1, 0
    %v41 = vcvt.s32.f32 %v39
    %v42 = vcvt.s32.f32 %v40
    %vm43 = vcmp.lt.s32.totalorder %v33, 240
    %vm44 = vcmp.lt.s32.totalorder %v34, 240
    %v45 = vsel %vm43, 1, 0
    %v46 = vsel %vm44, 1, 0
    %v47 = vcvt.s32.f32 %v45
    %v48 = vcvt.s32.f32 %v46
    %vm49 = vcmp.ge.s32.totalorder %v35, 1
    %vm50 = vcmp.ge.s32.totalorder %v36, 1
    %v51 = vsel %vm49, 1, 0
    %v52 = vsel %vm50, 1, 0
    %v53 = vcvt.s32.f32 %v51
    %v54 = vcvt.s32.f32 %v52
    %vm55 = vcmp.lt.s32.totalorder %v35, 15
    %vm56 = vcmp.lt.s32.totalorder %v36, 15
    %v57 = vsel %vm55, 1, 0
    %v58 = vsel %vm56, 1, 0
    %v59 = vcvt.s32.f32 %v57
    %v60 = vcvt.s32.f32 %v58
    %v61 = vld [vmem:[%s1] sm:$0xff]
    %v62 = vld [vmem:[%s1 + $0x8] sm:$0xff]
    %v63 = vld [vmem:[%s1 + $0x10] sm:$0xff]
    %v64 = vld [vmem:[#allocation2] sm:$0xff]
    %v65 = vld [vmem:[#allocation2 + $0x8] sm:$0xff]
    %v66 = vld [vmem:[#allocation2 + $0x10] sm:$0xff]
    %v67 = vld [vmem:[#allocation2 + $0x18] sm:$0xff]
    %v68 = vld [vmem:[#allocation2 + $0x20] sm:$0xff]
    %v69 = vld [vmem:[#allocation2 + $0x28] sm:$0xff]
    %v70 = vmax.f32 %v64, 0.0
    %v71 = vmax.f32 %v65, 0.0
    %v72 = vmax.f32 %v66, 0.0
    %v73 = vmax.f32 %v67, 0.0
    %v74 = vmax.f32 %v68, 0.0
    %v75 = vmax.f32 %v69, 0.0
    %76 = vrot.lane.b32.xlu0 %v70, 1
    %v77 = vpop.permute.xlu0 %76
    %78 = vrot.lane.b32.xlu0 %v72, 1
    %v79 = vpop.permute.xlu0 %78
    %80 = vrot.lane.b32.xlu0 %v74, 1
    %v81 = vpop.permute.xlu0 %80
    %82 = vrot.lane.b32.xlu0 %v71, 1
    %v83 = vpop.permute.xlu0 %82
    %84 = vrot.lane.b32.xlu0 %v73, 1
    %v85 = vpop.permute.xlu0 %84
    %86 = vrot.lane.b32.xlu0 %v75, 1
    %v87 = vpop.permute.xlu0 %86
    %vm88 = vcmp.lt.s32.totalorder %v33, 1
    %v89 = vsel %vm88, %v77, %v83
    %v90 = vsel %vm88, %v79, %v85
    %v91 = vsel %vm88, %v81, %v87
    %v92 = vsel %vm88, %v83, %v77
    %v93 = vsel %vm88, %v85, %v79
    %v94 = vsel %vm88, %v87, %v81
    %v95 = vmul.f32 %v92, %v53
    %v96 = vmul.f32 %v89, %v54
    %v97 = vmul.f32 %v93, %v53
    %v98 = vmul.f32 %v90, %v54
    %v99 = vmul.f32 %v94, %v53
    %v100 = vmul.f32 %v91, %v54
    %101 = vrot.lane.b32.xlu0 %v70, 127
    %v102 = vpop.permute.xlu0 %101
    %103 = vrot.lane.b32.xlu0 %v72, 127
    %v104 = vpop.permute.xlu0 %103
    %105 = vrot.lane.b32.xlu0 %v74, 127
    %v106 = vpop.permute.xlu0 %105
    %107 = vrot.lane.b32.xlu0 %v71, 127
    %v108 = vpop.permute.xlu0 %107
    %109 = vrot.lane.b32.xlu0 %v73, 127
    %v110 = vpop.permute.xlu0 %109
    %111 = vrot.lane.b32.xlu0 %v75, 127
    %v112 = vpop.permute.xlu0 %111
    %vm113 = vcmp.lt.s32.totalorder %v33, 127
    %v114 = vsel %vm113, %v102, %v108
    %v115 = vsel %vm113, %v104, %v110
    %v116 = vsel %vm113, %v106, %v112
    %v117 = vsel %vm113, %v108, %v102
    %v118 = vsel %vm113, %v110, %v104
    %v119 = vsel %vm113, %v112, %v106
    %v120 = vmul.f32 %v114, %v59
    %v121 = vmul.f32 %v117, %v60
    %v122 = vmul.f32 %v115, %v59
    %v123 = vmul.f32 %v118, %v60
    %v124 = vmul.f32 %v116, %v59
    %v125 = vmul.f32 %v119, %v60
    %127 = vset.pattern.permute.xlu0 0
    %128 = vperm.xlu0 %127, %v61
    %v129 = vpop.permute.xlu0 %128
    %132 = vset.pattern.permute.xlu0 0
    %133 = vperm.xlu0 %132, %v62
    %v134 = vpop.permute.xlu0 %133
    %137 = vset.pattern.permute.xlu0 0
    %138 = vperm.xlu0 %137, %v63
    %v139 = vpop.permute.xlu0 %138
    %v141 = vmul.f32 %v129, %v95
    %v142 = vmul.f32 %v129, %v96
    %v143 = vmul.f32 %v134, %v97
    %v144 = vmul.f32 %v134, %v98
    %v145 = vmul.f32 %v139, %v99
    %v146 = vmul.f32 %v139, %v100
    %147 = vset.pattern.permute.xlu0 1
    %148 = vperm.xlu0 %147, %v61
    %v149 = vpop.permute.xlu0 %148
    %151 = vset.pattern.permute.xlu0 1
    %152 = vperm.xlu0 %151, %v62
    %v153 = vpop.permute.xlu0 %152
    %155 = vset.pattern.permute.xlu0 1
    %156 = vperm.xlu0 %155, %v63
    %v157 = vpop.permute.xlu0 %156
    %v159 = vmul.f32 %v149, %v70
    %v160 = vmul.f32 %v149, %v71
    %v161 = vmul.f32 %v153, %v72
    %v162 = vmul.f32 %v153, %v73
    %v163 = vmul.f32 %v157, %v74
    %v164 = vmul.f32 %v157, %v75
    %v165 = vadd.f32 %v141, %v159
    %v166 = vadd.f32 %v142, %v160
    %v167 = vadd.f32 %v143, %v161
    %v168 = vadd.f32 %v144, %v162
    %v169 = vadd.f32 %v145, %v163
    %v170 = vadd.f32 %v146, %v164
    %171 = vset.pattern.permute.xlu0 2
    %172 = vperm.xlu0 %171, %v61
    %v173 = vpop.permute.xlu0 %172
    %175 = vset.pattern.permute.xlu0 2
    %176 = vperm.xlu0 %175, %v62
    %v177 = vpop.permute.xlu0 %176
    %179 = vset.pattern.permute.xlu0 2
    %180 = vperm.xlu0 %179, %v63
    %v181 = vpop.permute.xlu0 %180
    %v183 = vmul.f32 %v173, %v120
    %v184 = vmul.f32 %v173, %v121
    %v185 = vmul.f32 %v177, %v122
    %v186 = vmul.f32 %v177, %v123
    %v187 = vmul.f32 %v181, %v124
    %v188 = vmul.f32 %v181, %v125
    %v189 = vadd.f32 %v165, %v183
    %v190 = vadd.f32 %v166, %v184
    %v191 = vadd.f32 %v167, %v185
    %v192 = vadd.f32 %v168, %v186
    %v193 = vadd.f32 %v169, %v187
    %v194 = vadd.f32 %v170, %v188
    %195 = vset.pattern.permute.xlu0 3
    %196 = vperm.xlu0 %195, %v61
    %v197 = vpop.permute.xlu0 %196
    %199 = vset.pattern.permute.xlu0 3
    %200 = vperm.xlu0 %199, %v62
    %v201 = vpop.permute.xlu0 %200
    %203 = vset.pattern.permute.xlu0 3
    %204 = vperm.xlu0 %203, %v63
    %v205 = vpop.permute.xlu0 %204
    %v207 = vmul.f32 %v197, %v95
    %v208 = vmul.f32 %v197, %v96
    %v209 = vmul.f32 %v201, %v97
    %v210 = vmul.f32 %v201, %v98
    %v211 = vmul.f32 %v205, %v99
    %v212 = vmul.f32 %v205, %v100
    %213 = vset.pattern.permute.xlu0 4
    %214 = vperm.xlu0 %213, %v61
    %v215 = vpop.permute.xlu0 %214
    %217 = vset.pattern.permute.xlu0 4
    %218 = vperm.xlu0 %217, %v62
    %v219 = vpop.permute.xlu0 %218
    %221 = vset.pattern.permute.xlu0 4
    %222 = vperm.xlu0 %221, %v63
    %v223 = vpop.permute.xlu0 %222
    %v225 = vmul.f32 %v215, %v70
    %v226 = vmul.f32 %v215, %v71
    %v227 = vmul.f32 %v219, %v72
    %v228 = vmul.f32 %v219, %v73
    %v229 = vmul.f32 %v223, %v74
    %v230 = vmul.f32 %v223, %v75
    %v231 = vadd.f32 %v207, %v225
    %v232 = vadd.f32 %v208, %v226
    %v233 = vadd.f32 %v209, %v227
    %v234 = vadd.f32 %v210, %v228
    %v235 = vadd.f32 %v211, %v229
    %v236 = vadd.f32 %v212, %v230
    %237 = vset.pattern.permute.xlu0 5
    %238 = vperm.xlu0 %237, %v61
    %v239 = vpop.permute.xlu0 %238
    %241 = vset.pattern.permute.xlu0 5
    %242 = vperm.xlu0 %241, %v62
    %v243 = vpop.permute.xlu0 %242
    %245 = vset.pattern.permute.xlu0 5
    %246 = vperm.xlu0 %245, %v63
    %v247 = vpop.permute.xlu0 %246
    %v249 = vmul.f32 %v239, %v120
    %v250 = vmul.f32 %v239, %v121
    %v251 = vmul.f32 %v243, %v122
    %v252 = vmul.f32 %v243, %v123
    %v253 = vmul.f32 %v247, %v124
    %v254 = vmul.f32 %v247, %v125
    %v255 = vadd.f32 %v231, %v249
    %v256 = vadd.f32 %v232, %v250
    %v257 = vadd.f32 %v233, %v251
    %v258 = vadd.f32 %v234, %v252
    %v259 = vadd.f32 %v235, %v253
    %v260 = vadd.f32 %v236, %v254
    %261 = vset.pattern.permute.xlu0 6
    %262 = vperm.xlu0 %261, %v61
    %v263 = vpop.permute.xlu0 %262
    %265 = vset.pattern.permute.xlu0 6
    %266 = vperm.xlu0 %265, %v62
    %v267 = vpop.permute.xlu0 %266
    %269 = vset.pattern.permute.xlu0 6
    %270 = vperm.xlu0 %269, %v63
    %v271 = vpop.permute.xlu0 %270
    %v273 = vmul.f32 %v263, %v95
    %v274 = vmul.f32 %v263, %v96
    %v275 = vmul.f32 %v267, %v97
    %v276 = vmul.f32 %v267, %v98
    %v277 = vmul.f32 %v271, %v99
    %v278 = vmul.f32 %v271, %v100
    %279 = vset.pattern.permute.xlu0 7
    %280 = vperm.xlu0 %279, %v61
    %v281 = vpop.permute.xlu0 %280
    %283 = vset.pattern.permute.xlu0 7
    %284 = vperm.xlu0 %283, %v62
    %v285 = vpop.permute.xlu0 %284
    %287 = vset.pattern.permute.xlu0 7
    %288 = vperm.xlu0 %287, %v63
    %v289 = vpop.permute.xlu0 %288
    %v291 = vmul.f32 %v281, %v70
    %v292 = vmul.f32 %v281, %v71
    %v293 = vmul.f32 %v285, %v72
    %v294 = vmul.f32 %v285, %v73
    %v295 = vmul.f32 %v289, %v74
    %v296 = vmul.f32 %v289, %v75
    %v297 = vadd.f32 %v273, %v291
    %v298 = vadd.f32 %v274, %v292
    %v299 = vadd.f32 %v275, %v293
    %v300 = vadd.f32 %v276, %v294
    %v301 = vadd.f32 %v277, %v295
    %v302 = vadd.f32 %v278, %v296
    %303 = vset.pattern.permute.xlu0 8
    %304 = vperm.xlu0 %303, %v61
    %v305 = vpop.permute.xlu0 %304
    %307 = vset.pattern.permute.xlu0 8
    %308 = vperm.xlu0 %307, %v62
    %v309 = vpop.permute.xlu0 %308
    %311 = vset.pattern.permute.xlu0 8
    %312 = vperm.xlu0 %311, %v63
    %v313 = vpop.permute.xlu0 %312
    %v315 = vmul.f32 %v305, %v120
    %v316 = vmul.f32 %v305, %v121
    %v317 = vmul.f32 %v309, %v122
    %v318 = vmul.f32 %v309, %v123
    %v319 = vmul.f32 %v313, %v124
    %v320 = vmul.f32 %v313, %v125
    %v321 = vadd.f32 %v297, %v315
    %v322 = vadd.f32 %v298, %v316
    %v323 = vadd.f32 %v299, %v317
    %v324 = vadd.f32 %v300, %v318
    %v325 = vadd.f32 %v301, %v319
    %v326 = vadd.f32 %v302, %v320
    %327 = vrot.lane.b32.xlu0 %v189, 16
    %v328 = vpop.permute.xlu0 %327
    %329 = vrot.lane.b32.xlu0 %v191, 16
    %v330 = vpop.permute.xlu0 %329
    %331 = vrot.lane.b32.xlu0 %v193, 16
    %v332 = vpop.permute.xlu0 %331
    %333 = vrot.lane.b32.xlu0 %v190, 16
    %v334 = vpop.permute.xlu0 %333
    %335 = vrot.lane.b32.xlu0 %v192, 16
    %v336 = vpop.permute.xlu0 %335
    %337 = vrot.lane.b32.xlu0 %v194, 16
    %v338 = vpop.permute.xlu0 %337
    %vm339 = vcmp.lt.s32.totalorder %v33, 16
    %v340 = vsel %vm339, %v328, %v334
    %v341 = vsel %vm339, %v330, %v336
    %v342 = vsel %vm339, %v332, %v338
    %v343 = vsel %vm339, %v334, %v328
    %v344 = vsel %vm339, %v336, %v330
    %v345 = vsel %vm339, %v338, %v332
    %v346 = vmul.f32 %v343, %v41
    %v347 = vmul.f32 %v340, %v42
    %v348 = vmul.f32 %v344, %v41
    %v349 = vmul.f32 %v341, %v42
    %v350 = vmul.f32 %v345, %v41
    %v351 = vmul.f32 %v342, %v42
    %v352 = vadd.f32 %v255, %v346
    %v353 = vadd.f32 %v256, %v347
    %v354 = vadd.f32 %v257, %v348
    %v355 = vadd.f32 %v258, %v349
    %v356 = vadd.f32 %v259, %v350
    %v357 = vadd.f32 %v260, %v351
    %358 = vrot.lane.b32.xlu0 %v321, 112
    %v359 = vpop.permute.xlu0 %358
    %360 = vrot.lane.b32.xlu0 %v323, 112
    %v361 = vpop.permute.xlu0 %360
    %362 = vrot.lane.b32.xlu0 %v325, 112
    %v363 = vpop.permute.xlu0 %362
    %364 = vrot.lane.b32.xlu0 %v322, 112
    %v365 = vpop.permute.xlu0 %364
    %366 = vrot.lane.b32.xlu0 %v324, 112
    %v367 = vpop.permute.xlu0 %366
    %368 = vrot.lane.b32.xlu0 %v326, 112
    %v369 = vpop.permute.xlu0 %368
    %vm370 = vcmp.lt.s32.totalorder %v33, 112
    %v371 = vsel %vm370, %v359, %v365
    %v372 = vsel %vm370, %v361, %v367
    %v373 = vsel %vm370, %v363, %v369
    %v374 = vsel %vm370, %v365, %v359
    %v375 = vsel %vm370, %v367, %v361
    %v376 = vsel %vm370, %v369, %v363
    %v377 = vmul.f32 %v371, %v47
    %v378 = vmul.f32 %v374, %v48
    %v379 = vmul.f32 %v372, %v47
    %v380 = vmul.f32 %v375, %v48
    %v381 = vmul.f32 %v373, %v47
    %v382 = vmul.f32 %v376, %v48
    %v383 = vadd.f32 %v352, %v377
    %v384 = vadd.f32 %v353, %v378
    %v385 = vadd.f32 %v354, %v379
    %v386 = vadd.f32 %v355, %v380
    %v387 = vadd.f32 %v356, %v381
    %v388 = vadd.f32 %v357, %v382
    %v389 = vadd.f32 %v383, %v384
    %390 = vadd.xlane.f32.xlu0 %v389
    %v391 = vpop.xlane.xlu0 %390
    %v392 = vadd.f32 %v385, %v386
    %393 = vadd.xlane.f32.xlu0 %v392
    %v394 = vpop.xlane.xlu0 %393
    %v395 = vadd.f32 %v387, %v388
    %396 = vadd.xlane.f32.xlu0 %v395
    %v397 = vpop.xlane.xlu0 %396
    %v398 = vadd.f32 %v391, 0.0
    %v399 = vadd.f32 %v394, 0.0
    %v400 = vadd.f32 %v397, 0.0
    %v401 = vmul.f32 %v383, %v383
    %v402 = vmul.f32 %v384, %v384
    %v403 = vmul.f32 %v385, %v385
    %v404 = vmul.f32 %v386, %v386
    %v405 = vmul.f32 %v387, %v387
    %v406 = vmul.f32 %v388, %v388
    %v407 = vadd.f32 %v401, %v402
    %408 = vadd.xlane.f32.xlu0 %v407
    %v409 = vpop.xlane.xlu0 %408
    %v410 = vadd.f32 %v403, %v404
    %411 = vadd.xlane.f32.xlu0 %v410
    %v412 = vpop.xlane.xlu0 %411
    %v413 = vadd.f32 %v405, %v406
    %414 = vadd.xlane.f32.xlu0 %v413
    %v415 = vpop.xlane.xlu0 %414
    %v416 = vadd.f32 %v409, 0.0
    %v417 = vadd.f32 %v412, 0.0
    %v418 = vadd.f32 %v415, 0.0
    %s419 = scalar_lea.vmem [#allocation2], 48
    %v420 = vld [vmem:[%s419] sm:$0xff]
    %v421 = vld [vmem:[%s419 + $0x8] sm:$0xff]
    %v422 = vld [vmem:[%s419 + $0x10] sm:$0xff]
    %v423 = vld [vmem:[%s419 + $0x18] sm:$0xff]
    %v424 = vld [vmem:[%s419 + $0x20] sm:$0xff]
    %v425 = vld [vmem:[%s419 + $0x28] sm:$0xff]
    %v426 = vmax.f32 %v420, 0.0
    %v427 = vmax.f32 %v421, 0.0
    %v428 = vmax.f32 %v422, 0.0
    %v429 = vmax.f32 %v423, 0.0
    %v430 = vmax.f32 %v424, 0.0
    %v431 = vmax.f32 %v425, 0.0
    %432 = vrot.lane.b32.xlu0 %v426, 1
    %v433 = vpop.permute.xlu0 %432
    %434 = vrot.lane.b32.xlu0 %v428, 1
    %v435 = vpop.permute.xlu0 %434
    %436 = vrot.lane.b32.xlu0 %v430, 1
    %v437 = vpop.permute.xlu0 %436
    %438 = vrot.lane.b32.xlu0 %v427, 1
    %v439 = vpop.permute.xlu0 %438
    %440 = vrot.lane.b32.xlu0 %v429, 1
    %v441 = vpop.permute.xlu0 %440
    %442 = vrot.lane.b32.xlu0 %v431, 1
    %v443 = vpop.permute.xlu0 %442
    %v444 = vsel %vm88, %v433, %v439
    %v445 = vsel %vm88, %v435, %v441
    %v446 = vsel %vm88, %v437, %v443
    %v447 = vsel %vm88, %v439, %v433
    %v448 = vsel %vm88, %v441, %v435
    %v449 = vsel %vm88, %v443, %v437
    %v450 = vmul.f32 %v447, %v53
    %v451 = vmul.f32 %v444, %v54
    %v452 = vmul.f32 %v448, %v53
    %v453 = vmul.f32 %v445, %v54
    %v454 = vmul.f32 %v449, %v53
    %v455 = vmul.f32 %v446, %v54
    %456 = vrot.lane.b32.xlu0 %v426, 127
    %v457 = vpop.permute.xlu0 %456
    %458 = vrot.lane.b32.xlu0 %v428, 127
    %v459 = vpop.permute.xlu0 %458
    %460 = vrot.lane.b32.xlu0 %v430, 127
    %v461 = vpop.permute.xlu0 %460
    %462 = vrot.lane.b32.xlu0 %v427, 127
    %v463 = vpop.permute.xlu0 %462
    %464 = vrot.lane.b32.xlu0 %v429, 127
    %v465 = vpop.permute.xlu0 %464
    %466 = vrot.lane.b32.xlu0 %v431, 127
    %v467 = vpop.permute.xlu0 %466
    %v468 = vsel %vm113, %v457, %v463
    %v469 = vsel %vm113, %v459, %v465
    %v470 = vsel %vm113, %v461, %v467
    %v471 = vsel %vm113, %v463, %v457
    %v472 = vsel %vm113, %v465, %v459
    %v473 = vsel %vm113, %v467, %v461
    %v474 = vmul.f32 %v468, %v59
    %v475 = vmul.f32 %v471, %v60
    %v476 = vmul.f32 %v469, %v59
    %v477 = vmul.f32 %v472, %v60
    %v478 = vmul.f32 %v470, %v59
    %v479 = vmul.f32 %v473, %v60
    %v480 = vmul.f32 %v129, %v450
    %v481 = vmul.f32 %v129, %v451
    %v482 = vmul.f32 %v134, %v452
    %v483 = vmul.f32 %v134, %v453
    %v484 = vmul.f32 %v139, %v454
    %v485 = vmul.f32 %v139, %v455
    %v486 = vmul.f32 %v149, %v426
    %v487 = vmul.f32 %v149, %v427
    %v488 = vmul.f32 %v153, %v428
    %v489 = vmul.f32 %v153, %v429
    %v490 = vmul.f32 %v157, %v430
    %v491 = vmul.f32 %v157, %v431
    %v492 = vadd.f32 %v480, %v486
    %v493 = vadd.f32 %v481, %v487
    %v494 = vadd.f32 %v482, %v488
    %v495 = vadd.f32 %v483, %v489
    %v496 = vadd.f32 %v484, %v490
    %v497 = vadd.f32 %v485, %v491
    %v498 = vmul.f32 %v173, %v474
    %v499 = vmul.f32 %v173, %v475
    %v500 = vmul.f32 %v177, %v476
    %v501 = vmul.f32 %v177, %v477
    %v502 = vmul.f32 %v181, %v478
    %v503 = vmul.f32 %v181, %v479
    %v504 = vadd.f32 %v492, %v498
    %v505 = vadd.f32 %v493, %v499
    %v506 = vadd.f32 %v494, %v500
    %v507 = vadd.f32 %v495, %v501
    %v508 = vadd.f32 %v496, %v502
    %v509 = vadd.f32 %v497, %v503
    %v510 = vmul.f32 %v197, %v450
    %v511 = vmul.f32 %v197, %v451
    %v512 = vmul.f32 %v201, %v452
    %v513 = vmul.f32 %v201, %v453
    %v514 = vmul.f32 %v205, %v454
    %v515 = vmul.f32 %v205, %v455
    %v516 = vmul.f32 %v215, %v426
    %v517 = vmul.f32 %v215, %v427
    %v518 = vmul.f32 %v219, %v428
    %v519 = vmul.f32 %v219, %v429
    %v520 = vmul.f32 %v223, %v430
    %v521 = vmul.f32 %v223, %v431
    %v522 = vadd.f32 %v510, %v516
    %v523 = vadd.f32 %v511, %v517
    %v524 = vadd.f32 %v512, %v518
    %v525 = vadd.f32 %v513, %v519
    %v526 = vadd.f32 %v514, %v520
    %v527 = vadd.f32 %v515, %v521
    %v528 = vmul.f32 %v239, %v474
    %v529 = vmul.f32 %v239, %v475
    %v530 = vmul.f32 %v243, %v476
    %v531 = vmul.f32 %v243, %v477
    %v532 = vmul.f32 %v247, %v478
    %v533 = vmul.f32 %v247, %v479
    %v534 = vadd.f32 %v522, %v528
    %v535 = vadd.f32 %v523, %v529
    %v536 = vadd.f32 %v524, %v530
    %v537 = vadd.f32 %v525, %v531
    %v538 = vadd.f32 %v526, %v532
    %v539 = vadd.f32 %v527, %v533
    %v540 = vmul.f32 %v263, %v450
    %v541 = vmul.f32 %v263, %v451
    %v542 = vmul.f32 %v267, %v452
    %v543 = vmul.f32 %v267, %v453
    %v544 = vmul.f32 %v271, %v454
    %v545 = vmul.f32 %v271, %v455
    %v546 = vmul.f32 %v281, %v426
    %v547 = vmul.f32 %v281, %v427
    %v548 = vmul.f32 %v285, %v428
    %v549 = vmul.f32 %v285, %v429
    %v550 = vmul.f32 %v289, %v430
    %v551 = vmul.f32 %v289, %v431
    %v552 = vadd.f32 %v540, %v546
    %v553 = vadd.f32 %v541, %v547
    %v554 = vadd.f32 %v542, %v548
    %v555 = vadd.f32 %v543, %v549
    %v556 = vadd.f32 %v544, %v550
    %v557 = vadd.f32 %v545, %v551
    %v558 = vmul.f32 %v305, %v474
    %v559 = vmul.f32 %v305, %v475
    %v560 = vmul.f32 %v309, %v476
    %v561 = vmul.f32 %v309, %v477
    %v562 = vmul.f32 %v313, %v478
    %v563 = vmul.f32 %v313, %v479
    %v564 = vadd.f32 %v552, %v558
    %v565 = vadd.f32 %v553, %v559
    %v566 = vadd.f32 %v554, %v560
    %v567 = vadd.f32 %v555, %v561
    %v568 = vadd.f32 %v556, %v562
    %v569 = vadd.f32 %v557, %v563
    %570 = vrot.lane.b32.xlu0 %v504, 16
    %v571 = vpop.permute.xlu0 %570
    %572 = vrot.lane.b32.xlu0 %v506, 16
    %v573 = vpop.permute.xlu0 %572
    %574 = vrot.lane.b32.xlu0 %v508, 16
    %v575 = vpop.permute.xlu0 %574
    %576 = vrot.lane.b32.xlu0 %v505, 16
    %v577 = vpop.permute.xlu0 %576
    %578 = vrot.lane.b32.xlu0 %v507, 16
    %v579 = vpop.permute.xlu0 %578
    %580 = vrot.lane.b32.xlu0 %v509, 16
    %v581 = vpop.permute.xlu0 %580
    %v582 = vsel %vm339, %v571, %v577
    %v583 = vsel %vm339, %v573, %v579
    %v584 = vsel %vm339, %v575, %v581
    %v585 = vsel %vm339, %v577, %v571
    %v586 = vsel %vm339, %v579, %v573
    %v587 = vsel %vm339, %v581, %v575
    %v588 = vmul.f32 %v585, %v41
    %v589 = vmul.f32 %v582, %v42
    %v590 = vmul.f32 %v586, %v41
    %v591 = vmul.f32 %v583, %v42
    %v592 = vmul.f32 %v587, %v41
    %v593 = vmul.f32 %v584, %v42
    %v594 = vadd.f32 %v534, %v588
    %v595 = vadd.f32 %v535, %v589
    %v596 = vadd.f32 %v536, %v590
    %v597 = vadd.f32 %v537, %v591
    %v598 = vadd.f32 %v538, %v592
    %v599 = vadd.f32 %v539, %v593
    %600 = vrot.lane.b32.xlu0 %v564, 112
    %v601 = vpop.permute.xlu0 %600
    %602 = vrot.lane.b32.xlu0 %v566, 112
    %v603 = vpop.permute.xlu0 %602
    %604 = vrot.lane.b32.xlu0 %v568, 112
    %v605 = vpop.permute.xlu0 %604
    %606 = vrot.lane.b32.xlu0 %v565, 112
    %v607 = vpop.permute.xlu0 %606
    %608 = vrot.lane.b32.xlu0 %v567, 112
    %v609 = vpop.permute.xlu0 %608
    %610 = vrot.lane.b32.xlu0 %v569, 112
    %v611 = vpop.permute.xlu0 %610
    %v612 = vsel %vm370, %v601, %v607
    %v613 = vsel %vm370, %v603, %v609
    %v614 = vsel %vm370, %v605, %v611
    %v615 = vsel %vm370, %v607, %v601
    %v616 = vsel %vm370, %v609, %v603
    %v617 = vsel %vm370, %v611, %v605
    %v618 = vmul.f32 %v612, %v47
    %v619 = vmul.f32 %v615, %v48
    %v620 = vmul.f32 %v613, %v47
    %v621 = vmul.f32 %v616, %v48
    %v622 = vmul.f32 %v614, %v47
    %v623 = vmul.f32 %v617, %v48
    %v624 = vadd.f32 %v594, %v618
    %v625 = vadd.f32 %v595, %v619
    %v626 = vadd.f32 %v596, %v620
    %v627 = vadd.f32 %v597, %v621
    %v628 = vadd.f32 %v598, %v622
    %v629 = vadd.f32 %v599, %v623
    %v630 = vadd.f32 %v624, %v625
    %631 = vadd.xlane.f32.xlu0 %v630
    %v632 = vpop.xlane.xlu0 %631
    %v633 = vadd.f32 %v626, %v627
    %634 = vadd.xlane.f32.xlu0 %v633
    %v635 = vpop.xlane.xlu0 %634
    %v636 = vadd.f32 %v628, %v629
    %637 = vadd.xlane.f32.xlu0 %v636
    %v638 = vpop.xlane.xlu0 %637
    %v639 = vadd.f32 %v398, %v632
    %v640 = vadd.f32 %v399, %v635
    %v641 = vadd.f32 %v400, %v638
    %v642 = vmul.f32 %v624, %v624
    %v643 = vmul.f32 %v625, %v625
    %v644 = vmul.f32 %v626, %v626
    %v645 = vmul.f32 %v627, %v627
    %v646 = vmul.f32 %v628, %v628
    %v647 = vmul.f32 %v629, %v629
    %v648 = vadd.f32 %v642, %v643
    %649 = vadd.xlane.f32.xlu0 %v648
    %v650 = vpop.xlane.xlu0 %649
    %v651 = vadd.f32 %v644, %v645
    %652 = vadd.xlane.f32.xlu0 %v651
    %v653 = vpop.xlane.xlu0 %652
    %v654 = vadd.f32 %v646, %v647
    %655 = vadd.xlane.f32.xlu0 %v654
    %v656 = vpop.xlane.xlu0 %655
    %v657 = vadd.f32 %v416, %v650
    %v658 = vadd.f32 %v417, %v653
    %v659 = vadd.f32 %v418, %v656
    %v660 = vmul.f32 %v639, 0.001953125
    %v661 = vmul.f32 %v640, 0.001953125
    %v662 = vmul.f32 %v641, 0.001953125
    %v663 = vmul.f32 %v657, 0.001953125
    %v664 = vmul.f32 %v658, 0.001953125
    %v665 = vmul.f32 %v659, 0.001953125
    %v666 = vmul.f32 %v660, %v660
    %v667 = vmul.f32 %v661, %v661
    %v668 = vmul.f32 %v662, %v662
    %v669 = vsub.f32 %v663, %v666
    %v670 = vsub.f32 %v664, %v667
    %v671 = vsub.f32 %v665, %v668
    %v672 = vmax.f32 %v669, 0.0
    %v673 = vmax.f32 %v670, 0.0
    %v674 = vmax.f32 %v671, 0.0
    %v675 = vadd.f32 %v672, 0.001
    %v676 = vadd.f32 %v673, 0.001
    %v677 = vadd.f32 %v674, 0.001
    %v678 = vrsqrt.pop %v675
    %v679 = vrsqrt.pop %v676
    %v680 = vrsqrt.pop %v677
    %v681 = vld [vmem:[%s2] sm:$0xff]
    %v682 = vld [vmem:[%s2 + $0x8] sm:$0xff]
    %v683 = vld [vmem:[%s2 + $0x10] sm:$0xff]
    %v684 = vmul.f32 %v681, %v678
    %v685 = vmul.f32 %v682, %v679
    %v686 = vmul.f32 %v683, %v680
    %v687 = vld [vmem:[%s3] sm:$0xff]
    %v688 = vld [vmem:[%s3 + $0x8] sm:$0xff]
    %v689 = vld [vmem:[%s3 + $0x10] sm:$0xff]
    %v690 = vmul.f32 %v660, %v684
    %v691 = vmul.f32 %v661, %v685
    %v692 = vmul.f32 %v662, %v686
    %v693 = vsub.f32 %v687, %v690
    %v694 = vsub.f32 %v688, %v691
    %v695 = vsub.f32 %v689, %v692
    %697 = vset.pattern.permute.xlu0 0
    %698 = vperm.xlu0 %697, %v684
    %v699 = vpop.permute.xlu0 %698
    %702 = vset.pattern.permute.xlu0 0
    %703 = vperm.xlu0 %702, %v685
    %v704 = vpop.permute.xlu0 %703
    %707 = vset.pattern.permute.xlu0 0
    %708 = vperm.xlu0 %707, %v686
    %v709 = vpop.permute.xlu0 %708
    %v711 = vmul.f32 %v383, %v699
    %v712 = vmul.f32 %v384, %v699
    %v713 = vmul.f32 %v385, %v704
    %v714 = vmul.f32 %v386, %v704
    %v715 = vmul.f32 %v387, %v709
    %v716 = vmul.f32 %v388, %v709
    %718 = vset.pattern.permute.xlu0 0
    %719 = vperm.xlu0 %718, %v693
    %v720 = vpop.permute.xlu0 %719
    %723 = vset.pattern.permute.xlu0 0
    %724 = vperm.xlu0 %723, %v694
    %v725 = vpop.permute.xlu0 %724
    %728 = vset.pattern.permute.xlu0 0
    %729 = vperm.xlu0 %728, %v695
    %v730 = vpop.permute.xlu0 %729
    %v732 = vadd.f32 %v711, %v720
    %v733 = vadd.f32 %v712, %v720
    %v734 = vadd.f32 %v713, %v725
    %v735 = vadd.f32 %v714, %v725
    %v736 = vadd.f32 %v715, %v730
    %v737 = vadd.f32 %v716, %v730
    %v738 = vmax.f32 %v732, 0.0
    %v739 = vmax.f32 %v733, 0.0
    %v740 = vmax.f32 %v734, 0.0
    %v741 = vmax.f32 %v735, 0.0
    %v742 = vmax.f32 %v736, 0.0
    %v743 = vmax.f32 %v737, 0.0
    %744 = vst [vmem:[#allocation5] sm:$0xff] %v738
    %745 = vst [vmem:[#allocation5 + $0x8] sm:$0xff] %v739
    %746 = vst [vmem:[#allocation5 + $0x10] sm:$0xff] %v740
    %747 = vst [vmem:[#allocation5 + $0x18] sm:$0xff] %v741
    %748 = vst [vmem:[#allocation5 + $0x20] sm:$0xff] %v742
    %749 = vst [vmem:[#allocation5 + $0x28] sm:$0xff] %v743
    %v750 = vmul.f32 %v624, %v699
    %v751 = vmul.f32 %v625, %v699
    %v752 = vmul.f32 %v626, %v704
    %v753 = vmul.f32 %v627, %v704
    %v754 = vmul.f32 %v628, %v709
    %v755 = vmul.f32 %v629, %v709
    %v756 = vadd.f32 %v750, %v720
    %v757 = vadd.f32 %v751, %v720
    %v758 = vadd.f32 %v752, %v725
    %v759 = vadd.f32 %v753, %v725
    %v760 = vadd.f32 %v754, %v730
    %v761 = vadd.f32 %v755, %v730
    %v762 = vmax.f32 %v756, 0.0
    %v763 = vmax.f32 %v757, 0.0
    %v764 = vmax.f32 %v758, 0.0
    %v765 = vmax.f32 %v759, 0.0
    %v766 = vmax.f32 %v760, 0.0
    %v767 = vmax.f32 %v761, 0.0
    %s768 = scalar_lea.vmem [#allocation5], 48
    %769 = vst [vmem:[%s768] sm:$0xff] %v762
    %770 = vst [vmem:[%s768 + $0x8] sm:$0xff] %v763
    %771 = vst [vmem:[%s768 + $0x10] sm:$0xff] %v764
    %772 = vst [vmem:[%s768 + $0x18] sm:$0xff] %v765
    %773 = vst [vmem:[%s768 + $0x20] sm:$0xff] %v766
    %774 = vst [vmem:[%s768 + $0x28] sm:$0xff] %v767
    // Predicated region
    $region22: #{tpu_custom_call.1} parent=1 // pred_check
      _
    $region23: #{tpu_custom_call.1} parent=1 // pred_check_branch
      %776 = sbr.rel (0) target = $region25
    $region24: #{tpu_custom_call.1} parent=1 // pred_region
      %s778 = ssub.s32 1536, 1536
      %779 = vsyncadd [#allocation4], %s778
      %s780 = sshll.u32 [#allocation5], 4
      %s781 = int_to_ptr.vmem [resolvable:$true] %s780
      %786 = dma.vmem_to_hbm [thread:$0]  %s781, 1536, %s4, [#allocation4], 256, 256, 16
    $region25: #{tpu_custom_call.1} parent=1 // pred_fallthru
      _
    // Predicated region
    $region26: #{tpu_custom_call.1} parent=1 // pred_check
      _
    $region27: #{tpu_custom_call.1} parent=1 // pred_check_branch
      %788 = sbr.rel (0) target = $region29
    $region28: #{tpu_custom_call.1} parent=1 // pred_region
      %789 = dma.done [#allocation4], 1536
    $region29: #{tpu_custom_call.1} parent=1 // pred_fallthru
      _
    %790 = vsyncpa [#allocation3], 1
    %791 = vsyncpa [#allocation4], 1

</llo_original>
